<compile_context>
chip_gen: v6e
topology: v6e:2x2x1
jax: 0.10.0
libtpu: 0.0.40
codegen_flags: <defaults>
</compile_context>

<pallas_src>
import math

import jax
import jax.numpy as jnp
from jax.experimental import pallas as pl
from jax.experimental.pallas import tpu as pltpu


def resgcn_kernel(a_ref, xk_ref, xi_ref, invd_ref, w_ref, b_ref, o_ref,
                  acc_ref, z_ref):
    k = pl.program_id(1)

    @pl.when(k == 0)
    def _init():
        acc_ref[...] = jnp.zeros_like(acc_ref)

    # Unnormalized aggregation: acc += A_tile @ x_tile (bf16 operands, f32 acc).
    acc_ref[...] += jnp.dot(a_ref[...], xk_ref[...],
                            preferred_element_type=jnp.float32)

    @pl.when(k == pl.num_programs(1) - 1)
    def _finalize():
        cp = acc_ref.shape[-1]
        agg = acc_ref[...] * invd_ref[...]          # f32 mean (1/deg) scaling
        x_i = xi_ref[...]                           # f32 row tile of x
        # Fused [agg | x] @ [W_l^T ; W_r^T] -> one K = 2*Cp bf16 MXU pass.
        z_ref[:, :cp] = agg.astype(jnp.bfloat16)
        z_ref[:, cp:] = x_i.astype(jnp.bfloat16)
        out = jnp.dot(z_ref[...], w_ref[...],
                      preferred_element_type=jnp.float32)
        # Bias + residual kept in f32.
        o_ref[...] = (out + b_ref[...] + x_i).astype(o_ref.dtype)


def resgcn_layer(x, edge_index, w_l, b_l, w_r, *, tm=128, tk=128):
    """x: [N, C] float32; edge_index: [2, E] int32 (row 0 = src, row 1 = dst)."""
    n, c = x.shape
    cp = ((c + 127) // 128) * 128                     # lane-dense channel width
    blk = math.lcm(tm, tk)
    n_pad = ((n + blk - 1) // blk) * blk              # node dim -> tile multiple

    src, dst = edge_index[0], edge_index[1]

    # Unnormalized dense adjacency (edge counts) in bf16 -- exact for small counts.
    # TODO(synk): replace the dense N^2 A@x with CSR row-ptr scalar prefetch +
    # manual DMA gather of neighbor rows (paged-attention-style) for E << N^2.
    a = jnp.zeros((n_pad, n_pad), jnp.float32).at[dst, src].add(1.0)
    a_bf16 = a.astype(jnp.bfloat16)

    # In-degree (with multi-edges) straight from edge_index; no N^2 normalize pass.
    deg = jnp.zeros((n_pad,), jnp.float32).at[dst].add(1.0)
    inv_deg = jnp.where(deg > 0.0, 1.0 / deg, 0.0).reshape(n_pad, 1)

    # Pad features; bf16 copy feeds the aggregation matmul, f32 copy feeds the
    # root/residual path.
    x_f32 = jnp.zeros((n_pad, cp), jnp.float32).at[:n, :c].set(
        x.astype(jnp.float32))
    x_bf16 = x_f32.astype(jnp.bfloat16)

    # Fused weights: z = [agg | x] (width 2*cp), W = [W_l^T ; W_r^T] -> [2cp, cp].
    w_fused = jnp.zeros((2 * cp, cp), jnp.float32)
    w_fused = w_fused.at[:c, :c].set(w_l.T)
    w_fused = w_fused.at[cp:cp + c, :c].set(w_r.T)
    w_fused = w_fused.astype(jnp.bfloat16)
    b_pad = jnp.zeros((1, cp), jnp.float32).at[0, :c].set(b_l)

    grid = (n_pad // tm, n_pad // tk)
    flops = 2 * n_pad * n_pad * cp + 2 * n_pad * (2 * cp) * cp
    bytes_accessed = (a_bf16.size * 2                       # adjacency stream
                      + x_bf16.size * 2 * grid[0]           # x re-streamed per row tile
                      + x_f32.size * 4 + inv_deg.size * 4
                      + w_fused.size * 2 + b_pad.size * 4
                      + n_pad * cp * 4)                     # output

    out_pad = pl.pallas_call(
        resgcn_kernel,
        out_shape=jax.ShapeDtypeStruct((n_pad, cp), x.dtype),
        grid_spec=pltpu.PrefetchScalarGridSpec(
            num_scalar_prefetch=0,
            grid=grid,
            in_specs=[
                pl.BlockSpec((tm, tk), lambda i, k: (i, k)),       # A tile
                pl.BlockSpec((tk, cp), lambda i, k: (k, 0)),       # x (agg source)
                pl.BlockSpec((tm, cp), lambda i, k: (i, 0)),       # x (root/residual)
                pl.BlockSpec((tm, 1), lambda i, k: (i, 0)),        # 1/deg
                pl.BlockSpec((2 * cp, cp), lambda i, k: (0, 0)),   # fused weights
                pl.BlockSpec((1, cp), lambda i, k: (0, 0)),        # bias
            ],
            out_specs=pl.BlockSpec((tm, cp), lambda i, k: (i, 0)),
            scratch_shapes=[
                pltpu.VMEM((tm, cp), jnp.float32),       # f32 agg accumulator
                pltpu.VMEM((tm, 2 * cp), jnp.bfloat16),  # fused-matmul operand slab
            ],
        ),
        compiler_params=pltpu.CompilerParams(
            dimension_semantics=("parallel", "arbitrary"),
            vmem_limit_bytes=32 * 1024 * 1024,
        ),
        cost_estimate=pl.CostEstimate(
            flops=flops, transcendentals=0, bytes_accessed=bytes_accessed),
    )(a_bf16, x_bf16, x_f32, inv_deg, w_fused, b_pad)

    return out_pad[:n, :c]


if __name__ == "__main__":
    N, C, E = 16, 32, 48          # nodes, channels (in == out for residual), edges

    key = jax.random.PRNGKey(0)
    kx, ke1, ke2, kwl, kbl, kwr = jax.random.split(key, 6)

    x = jax.random.normal(kx, (N, C), dtype=jnp.float32)
    edge_index = jnp.stack(
        [jax.random.randint(ke1, (E,), 0, N, dtype=jnp.int32),
         jax.random.randint(ke2, (E,), 0, N, dtype=jnp.int32)], axis=0)

    # SAGEConv parameters: lin_l (weight + bias), lin_r (weight only), [out, in].
    w_l = jax.random.normal(kwl, (C, C), dtype=jnp.float32) * 0.1
    b_l = jax.random.normal(kbl, (C,), dtype=jnp.float32) * 0.1
    w_r = jax.random.normal(kwr, (C, C), dtype=jnp.float32) * 0.1

    out = jax.jit(resgcn_layer)(x, edge_index, w_l, b_l, w_r)
    out = jax.block_until_ready(out)

    # Pure-f32 JAX reference of the module semantics.
    a_ref = jnp.zeros((N, N), jnp.float32).at[edge_index[1], edge_index[0]].add(1.0)
    a_ref = a_ref / jnp.maximum(jnp.sum(a_ref, axis=1, keepdims=True), 1.0)
    agg = a_ref @ x
    ref = agg @ w_l.T + b_l + x @ w_r.T + x

    assert out.shape == (N, C) and out.dtype == jnp.float32
    # Kernel uses bf16 MXU operands with f32 accumulation -> bf16-level tolerance.
    assert jnp.allclose(out, ref, atol=5e-2, rtol=5e-2), "mismatch vs reference"
    print("KERNEL_OK")
</pallas_src>

<mosaic_0001>
module attributes {stable_mosaic.version = 11 : i64} {
  func.func private @main(%arg0: i32) attributes {dimension_semantics = [#tpu.dimension_semantics<core_parallel>], iteration_bounds = array<i64: 2>, tpu.core_type = #tpu.core_type<sc_scalar_subcore>, window_params = []} {
    return
  }
}

module attributes {stable_mosaic.version = 11 : i64} {
  func.func private @main(%arg0: i32) attributes {dimension_semantics = [#tpu.dimension_semantics<core_parallel>], iteration_bounds = array<i64: 2>, tpu.core_type = #tpu.core_type<sc_scalar_subcore>, window_params = []} {
    return
  }
}

module attributes {stable_mosaic.version = 11 : i64} {
  func.func @resgcn_kernel(%arg0: i32, %arg1: i32, %arg2: memref<128x128xbf16, #tpu.memory_space<vmem>>, %arg3: memref<128x128xbf16, #tpu.memory_space<vmem>>, %arg4: memref<128x128xf32, #tpu.memory_space<vmem>>, %arg5: memref<128x1xf32, #tpu.memory_space<vmem>>, %arg6: memref<256x128xbf16, #tpu.memory_space<vmem>>, %arg7: memref<1x128xf32, #tpu.memory_space<vmem>>, %arg8: memref<128x128xf32, #tpu.memory_space<vmem>>, %arg9: memref<128x128xf32, #tpu.memory_space<vmem>>, %arg10: memref<128x256xbf16, #tpu.memory_space<vmem>>) attributes {dimension_semantics = [#tpu.dimension_semantics<parallel>, #tpu.dimension_semantics<arbitrary>], iteration_bounds = array<i64: 1, 1>, scalar_prefetch = 0 : i64, scratch_operands = 2 : i64, tpu.core_type = #tpu.core_type<tc>, window_params = [{transform_indices = @transform_0, window_bounds = array<i64: 128, 128>}, {transform_indices = @transform_1, window_bounds = array<i64: 128, 128>}, {transform_indices = @transform_2, window_bounds = array<i64: 128, 128>}, {transform_indices = @transform_3, window_bounds = array<i64: 128, 1>}, {pipeline_mode = #tpu.pipeline_mode<synchronous>, transform_indices = @transform_4, window_bounds = array<i64: 256, 128>}, {pipeline_mode = #tpu.pipeline_mode<synchronous>, transform_indices = @transform_5, window_bounds = array<i64: 1, 128>}, {transform_indices = @transform_6, window_bounds = array<i64: 128, 128>}]} {
    %c0_i32 = arith.constant 0 : i32
    %0 = arith.cmpi eq, %arg1, %c0_i32 : i32
    %1 = arith.extui %0 : i1 to i32
    %c0_i32_0 = arith.constant 0 : i32
    %2 = arith.cmpi ne, %1, %c0_i32_0 : i32
    scf.if %2 {
      %cst_10 = arith.constant 0.000000e+00 : f32
      %12 = vector.broadcast %cst_10 : f32 to vector<128x128xf32>
      %c0_11 = arith.constant 0 : index
      %c0_12 = arith.constant 0 : index
      %13 = vector.load %arg9[%c0_11, %c0_12] : memref<128x128xf32, #tpu.memory_space<vmem>>, vector<128x128xf32>
      tpu.vector_store %arg9[%c0_11, %c0_12], %12 {strides = array<i32>} : memref<128x128xf32, #tpu.memory_space<vmem>>, vector<128x128xf32>,
    } else {
    }
    %c0 = arith.constant 0 : index
    %c0_1 = arith.constant 0 : index
    %3 = vector.load %arg9[%c0, %c0_1] : memref<128x128xf32, #tpu.memory_space<vmem>>, vector<128x128xf32>
    %c0_2 = arith.constant 0 : index
    %c0_3 = arith.constant 0 : index
    %4 = vector.load %arg2[%c0_2, %c0_3] : memref<128x128xbf16, #tpu.memory_space<vmem>>, vector<128x128xbf16>
    %c0_4 = arith.constant 0 : index
    %c0_5 = arith.constant 0 : index
    %5 = vector.load %arg3[%c0_4, %c0_5] : memref<128x128xbf16, #tpu.memory_space<vmem>>, vector<128x128xbf16>
    %cst = arith.constant dense<0.000000e+00> : vector<128x128xf32>
    %6 = tpu.matmul %4, %5, %cst {dimension_numbers = #tpu.dot_dimension_numbers<[1], [0], [0], [1], [0, 0, 1, 1], [], []>} : vector<128x128xbf16>, vector<128x128xbf16>, vector<128x128xf32> -> vector<128x128xf32>
    %7 = arith.addf %3, %6 : vector<128x128xf32>
    %c0_6 = arith.constant 0 : index
    %c0_7 = arith.constant 0 : index
    %8 = vector.load %arg9[%c0_6, %c0_7] : memref<128x128xf32, #tpu.memory_space<vmem>>, vector<128x128xf32>
    tpu.vector_store %arg9[%c0_6, %c0_7], %7 {strides = array<i32>} : memref<128x128xf32, #tpu.memory_space<vmem>>, vector<128x128xf32>,
    %c0_i32_8 = arith.constant 0 : i32
    %9 = arith.cmpi eq, %arg1, %c0_i32_8 : i32
    %10 = arith.extui %9 : i1 to i32
    %c0_i32_9 = arith.constant 0 : i32
    %11 = arith.cmpi ne, %10, %c0_i32_9 : i32
    scf.if %11 {
      %c0_10 = arith.constant 0 : index
      %c0_11 = arith.constant 0 : index
      %12 = vector.load %arg9[%c0_10, %c0_11] : memref<128x128xf32, #tpu.memory_space<vmem>>, vector<128x128xf32>
      %c0_12 = arith.constant 0 : index
      %c0_13 = arith.constant 0 : index
      %13 = vector.load %arg5[%c0_12, %c0_13] : memref<128x1xf32, #tpu.memory_space<vmem>>, vector<128x1xf32>
      %14 = vector.broadcast %13 : vector<128x1xf32> to vector<128x128xf32>
      %15 = arith.mulf %12, %14 : vector<128x128xf32>
      %c0_14 = arith.constant 0 : index
      %c0_15 = arith.constant 0 : index
      %16 = vector.load %arg4[%c0_14, %c0_15] : memref<128x128xf32, #tpu.memory_space<vmem>>, vector<128x128xf32>
      %17 = arith.truncf %15 : vector<128x128xf32> to vector<128x128xbf16>
      %c0_16 = arith.constant 0 : index
      %c0_17 = arith.constant 0 : index
      %18 = vector.load %arg10[%c0_16, %c0_17] : memref<128x256xbf16, #tpu.memory_space<vmem>>, vector<128x128xbf16>
      tpu.vector_store %arg10[%c0_16, %c0_17], %17 {strides = array<i32>} : memref<128x256xbf16, #tpu.memory_space<vmem>>, vector<128x128xbf16>,
      %19 = arith.truncf %16 : vector<128x128xf32> to vector<128x128xbf16>
      %c0_18 = arith.constant 0 : index
      %c128 = arith.constant 128 : index
      %20 = vector.load %arg10[%c0_18, %c128] : memref<128x256xbf16, #tpu.memory_space<vmem>>, vector<128x128xbf16>
      tpu.vector_store %arg10[%c0_18, %c128], %19 {strides = array<i32>} : memref<128x256xbf16, #tpu.memory_space<vmem>>, vector<128x128xbf16>,
      %c0_19 = arith.constant 0 : index
      %c0_20 = arith.constant 0 : index
      %21 = vector.load %arg10[%c0_19, %c0_20] : memref<128x256xbf16, #tpu.memory_space<vmem>>, vector<128x256xbf16>
      %c0_21 = arith.constant 0 : index
      %c0_22 = arith.constant 0 : index
      %22 = vector.load %arg6[%c0_21, %c0_22] : memref<256x128xbf16, #tpu.memory_space<vmem>>, vector<256x128xbf16>
      %cst_23 = arith.constant dense<0.000000e+00> : vector<128x128xf32>
      %23 = tpu.matmul %21, %22, %cst_23 {dimension_numbers = #tpu.dot_dimension_numbers<[1], [0], [0], [1], [0, 0, 1, 1], [], []>} : vector<128x256xbf16>, vector<256x128xbf16>, vector<128x128xf32> -> vector<128x128xf32>
      %c0_24 = arith.constant 0 : index
      %c0_25 = arith.constant 0 : index
      %24 = vector.load %arg7[%c0_24, %c0_25] : memref<1x128xf32, #tpu.memory_space<vmem>>, vector<1x128xf32>
      %25 = vector.broadcast %24 : vector<1x128xf32> to vector<128x128xf32>
      %26 = arith.addf %23, %25 : vector<128x128xf32>
      %27 = arith.addf %26, %16 : vector<128x128xf32>
      %c0_26 = arith.constant 0 : index
      %c0_27 = arith.constant 0 : index
      %28 = vector.load %arg8[%c0_26, %c0_27] : memref<128x128xf32, #tpu.memory_space<vmem>>, vector<128x128xf32>
      tpu.vector_store %arg8[%c0_26, %c0_27], %27 {strides = array<i32>} : memref<128x128xf32, #tpu.memory_space<vmem>>, vector<128x128xf32>,
    } else {
    }
    return
  }
  func.func @transform_0(%arg0: i32, %arg1: i32) -> (i32, i32) {
    %c0_i32 = arith.constant 0 : i32
    return %arg0, %arg1 : i32, i32
  }
  func.func @transform_1(%arg0: i32, %arg1: i32) -> (i32, i32) {
    %c0_i32 = arith.constant 0 : i32
    %c0_i32_0 = arith.constant 0 : i32
    return %arg1, %c0_i32 : i32, i32
  }
  func.func @transform_2(%arg0: i32, %arg1: i32) -> (i32, i32) {
    %c0_i32 = arith.constant 0 : i32
    %c0_i32_0 = arith.constant 0 : i32
    return %arg0, %c0_i32 : i32, i32
  }
  func.func @transform_3(%arg0: i32, %arg1: i32) -> (i32, i32) {
    %c0_i32 = arith.constant 0 : i32
    %c0_i32_0 = arith.constant 0 : i32
    return %arg0, %c0_i32 : i32, i32
  }
  func.func @transform_4(%arg0: i32, %arg1: i32) -> (i32, i32) {
    %c0_i32 = arith.constant 0 : i32
    %c0_i32_0 = arith.constant 0 : i32
    %c0_i32_1 = arith.constant 0 : i32
    return %c0_i32, %c0_i32_0 : i32, i32
  }
  func.func @transform_5(%arg0: i32, %arg1: i32) -> (i32, i32) {
    %c0_i32 = arith.constant 0 : i32
    %c0_i32_0 = arith.constant 0 : i32
    %c0_i32_1 = arith.constant 0 : i32
    return %c0_i32, %c0_i32_0 : i32, i32
  }
  func.func @transform_6(%arg0: i32, %arg1: i32) -> (i32, i32) {
    %c0_i32 = arith.constant 0 : i32
    %c0_i32_0 = arith.constant 0 : i32
    return %arg0, %c0_i32 : i32, i32
  }
}

</mosaic_0001>

<llo_original>
// kernel: resgcn_layer.1
$region0: #{resgcn_layer.1}
  #allocation0 [shape = 'u32[]', space=smem, size = 0x4, offset = 0x4, fixed_abs, tag = 'smem constant byte address 0x4 - core index']
  #allocation1 [shape = 'u32[144,128]{1,0:T(1,128)}', space=vmem, size = 0x12000, scoped, tag = 'internal scratch']
  #allocation2 [shape = 'f32[128,128]{1,0:T(8,128)}', space=vmem, size = 0x10000, scoped, tag = 'scratch operand']
  #allocation3 [shape = 'bf16[128,256]{1,0:T(8,128)(2,1)}', space=vmem, size = 0x10000, scoped, tag = 'scratch operand']
  %s0 = inlined_call_operand.vmem [shape: bf16[128,128], index: 0, kind: input, shape index: {}]
  %s1 = inlined_call_operand.vmem [shape: bf16[128,128], index: 1, kind: input, shape index: {}]
  %s2 = inlined_call_operand.vmem [shape: f32[128,128], index: 2, kind: input, shape index: {}]
  %s3 = inlined_call_operand.vmem [shape: f32[128,1], index: 3, kind: input, shape index: {}]
  %s4 = inlined_call_operand.vmem [shape: bf16[256,128], index: 4, kind: input, shape index: {}]
  %s5 = inlined_call_operand.vmem [shape: f32[1,128], index: 5, kind: input, shape index: {}]
  %s6 = inlined_call_operand.vmem [shape: f32[128,128], index: 6, kind: output, shape index: {}]
  %s7 = sld [smem:[#allocation0]]
  $region42: #{resgcn_layer.1} parent=0
    _
  %s9 = ssub.s32 1, %s7
  %s10 = scalar_select 0, %s9, %s7
  // Predicated region
  $region2: #{resgcn_layer.1} parent=0 // pred_check
    _
  $region3: #{resgcn_layer.1} parent=0 // pred_check_branch
    %12 = sbr.rel (0) target = $region5
  $region4: #{resgcn_layer.1} parent=0 // pred_region
    _
  $region5: #{resgcn_layer.1} parent=0 // pred_fallthru
    _
  // Predicated region
  $region6: #{resgcn_layer.1} parent=0 // pred_check
    _
  $region7: #{resgcn_layer.1} parent=0 // pred_check_branch
    %14 = sbr.rel (0) target = $region9
  $region8: #{resgcn_layer.1} parent=0 // pred_region
    _
  $region9: #{resgcn_layer.1} parent=0 // pred_fallthru
    _
  // Predicated region
  $region10: #{resgcn_layer.1} parent=0 // pred_check
    _
  $region11: #{resgcn_layer.1} parent=0 // pred_check_branch
    %16 = sbr.rel (0) target = $region13
  $region12: #{resgcn_layer.1} parent=0 // pred_region
    _
  $region13: #{resgcn_layer.1} parent=0 // pred_fallthru
    _
  // Predicated region
  $region14: #{resgcn_layer.1} parent=0 // pred_check
    _
  $region15: #{resgcn_layer.1} parent=0 // pred_check_branch
    %18 = sbr.rel (0) target = $region17
  $region16: #{resgcn_layer.1} parent=0 // pred_region
    _
  $region17: #{resgcn_layer.1} parent=0 // pred_fallthru
    _
  // Predicated region
  $region18: #{resgcn_layer.1} parent=0 // pred_check
    _
  $region19: #{resgcn_layer.1} parent=0 // pred_check_branch
    %20 = sbr.rel (0) target = $region21
  $region20: #{resgcn_layer.1} parent=0 // pred_region
    _
  $region21: #{resgcn_layer.1} parent=0 // pred_fallthru
    _
  // Predicated region
  $region22: #{resgcn_layer.1} parent=0 // pred_check
    _
  $region23: #{resgcn_layer.1} parent=0 // pred_check_branch
    %22 = sbr.rel (0) target = $region25
  $region24: #{resgcn_layer.1} parent=0 // pred_region
    _
  $region25: #{resgcn_layer.1} parent=0 // pred_fallthru
    _
  %p24 = scmp.eq.s32.totalorder 0, 0
  // Predicated region
  $region26: #{resgcn_layer.1} parent=0 // pred_check
    %p25 = pneg %p24
  $region27: #{resgcn_layer.1} parent=0 // pred_check_branch
    %27 = sbr.rel (%p25) target = $region29
  $region28: #{resgcn_layer.1} parent=0 // pred_region
    %28 = vst [vmem:[#allocation2] sm:$0xff] 0.0
    %29 = vst [vmem:[#allocation2 + $0x8] sm:$0xff] 0.0
    %30 = vst [vmem:[#allocation2 + $0x10] sm:$0xff] 0.0
    %31 = vst [vmem:[#allocation2 + $0x18] sm:$0xff] 0.0
    %32 = vst [vmem:[#allocation2 + $0x20] sm:$0xff] 0.0
    %33 = vst [vmem:[#allocation2 + $0x28] sm:$0xff] 0.0
    %34 = vst [vmem:[#allocation2 + $0x30] sm:$0xff] 0.0
    %35 = vst [vmem:[#allocation2 + $0x38] sm:$0xff] 0.0
    %36 = vst [vmem:[#allocation2 + $0x40] sm:$0xff] 0.0
    %37 = vst [vmem:[#allocation2 + $0x48] sm:$0xff] 0.0
    %38 = vst [vmem:[#allocation2 + $0x50] sm:$0xff] 0.0
    %39 = vst [vmem:[#allocation2 + $0x58] sm:$0xff] 0.0
    %40 = vst [vmem:[#allocation2 + $0x60] sm:$0xff] 0.0
    %41 = vst [vmem:[#allocation2 + $0x68] sm:$0xff] 0.0
    %42 = vst [vmem:[#allocation2 + $0x70] sm:$0xff] 0.0
    %43 = vst [vmem:[#allocation2 + $0x78] sm:$0xff] 0.0
  $region29: #{resgcn_layer.1} parent=0 // pred_fallthru
    _
  %v44 = vld [vmem:[#allocation2] sm:$0xff]
  %v45 = vld [vmem:[#allocation2 + $0x8] sm:$0xff]
  %v46 = vld [vmem:[#allocation2 + $0x10] sm:$0xff]
  %v47 = vld [vmem:[#allocation2 + $0x18] sm:$0xff]
  %v48 = vld [vmem:[#allocation2 + $0x20] sm:$0xff]
  %v49 = vld [vmem:[#allocation2 + $0x28] sm:$0xff]
  %v50 = vld [vmem:[#allocation2 + $0x30] sm:$0xff]
  %v51 = vld [vmem:[#allocation2 + $0x38] sm:$0xff]
  %v52 = vld [vmem:[#allocation2 + $0x40] sm:$0xff]
  %v53 = vld [vmem:[#allocation2 + $0x48] sm:$0xff]
  %v54 = vld [vmem:[#allocation2 + $0x50] sm:$0xff]
  %v55 = vld [vmem:[#allocation2 + $0x58] sm:$0xff]
  %v56 = vld [vmem:[#allocation2 + $0x60] sm:$0xff]
  %v57 = vld [vmem:[#allocation2 + $0x68] sm:$0xff]
  %v58 = vld [vmem:[#allocation2 + $0x70] sm:$0xff]
  %v59 = vld [vmem:[#allocation2 + $0x78] sm:$0xff]
  %v60 = vld [vmem:[%s0] sm:$0xf]
  %v61 = vld [vmem:[%s0 + $0x4] sm:$0xf]
  %v62 = vld [vmem:[%s0 + $0x8] sm:$0xf]
  %v63 = vld [vmem:[%s0 + $0xc] sm:$0xf]
  %v64 = vld [vmem:[%s0 + $0x10] sm:$0xf]
  %v65 = vld [vmem:[%s0 + $0x14] sm:$0xf]
  %v66 = vld [vmem:[%s0 + $0x18] sm:$0xf]
  %v67 = vld [vmem:[%s0 + $0x1c] sm:$0xf]
  %v68 = vld [vmem:[%s0 + $0x20] sm:$0xf]
  %v69 = vld [vmem:[%s0 + $0x24] sm:$0xf]
  %v70 = vld [vmem:[%s0 + $0x28] sm:$0xf]
  %v71 = vld [vmem:[%s0 + $0x2c] sm:$0xf]
  %v72 = vld [vmem:[%s0 + $0x30] sm:$0xf]
  %v73 = vld [vmem:[%s0 + $0x34] sm:$0xf]
  %v74 = vld [vmem:[%s0 + $0x38] sm:$0xf]
  %v75 = vld [vmem:[%s0 + $0x3c] sm:$0xf]
  %v76 = vld [vmem:[%s1] sm:$0xf]
  %v77 = vld [vmem:[%s1 + $0x4] sm:$0xf]
  %v78 = vld [vmem:[%s1 + $0x8] sm:$0xf]
  %v79 = vld [vmem:[%s1 + $0xc] sm:$0xf]
  %v80 = vld [vmem:[%s1 + $0x10] sm:$0xf]
  %v81 = vld [vmem:[%s1 + $0x14] sm:$0xf]
  %v82 = vld [vmem:[%s1 + $0x18] sm:$0xf]
  %v83 = vld [vmem:[%s1 + $0x1c] sm:$0xf]
  %v84 = vld [vmem:[%s1 + $0x20] sm:$0xf]
  %v85 = vld [vmem:[%s1 + $0x24] sm:$0xf]
  %v86 = vld [vmem:[%s1 + $0x28] sm:$0xf]
  %v87 = vld [vmem:[%s1 + $0x2c] sm:$0xf]
  %v88 = vld [vmem:[%s1 + $0x30] sm:$0xf]
  %v89 = vld [vmem:[%s1 + $0x34] sm:$0xf]
  %v90 = vld [vmem:[%s1 + $0x38] sm:$0xf]
  %v91 = vld [vmem:[%s1 + $0x3c] sm:$0xf]
  %v108 = vunpack.c.l.b16 %v60
  %v109 = vunpack.c.l.b16 %v61
  %v110 = vunpack.c.l.b16 %v62
  %v111 = vunpack.c.l.b16 %v63
  %v112 = vunpack.c.l.b16 %v64
  %v113 = vunpack.c.l.b16 %v65
  %v114 = vunpack.c.l.b16 %v66
  %v115 = vunpack.c.l.b16 %v67
  %v116 = vunpack.c.l.b16 %v68
  %v117 = vunpack.c.l.b16 %v69
  %v118 = vunpack.c.l.b16 %v70
  %v119 = vunpack.c.l.b16 %v71
  %v120 = vunpack.c.l.b16 %v72
  %v121 = vunpack.c.l.b16 %v73
  %v122 = vunpack.c.l.b16 %v74
  %v123 = vunpack.c.l.b16 %v75
  %v124 = vpack.c.b16 %v109, %v108
  %v125 = vpack.c.b16 %v111, %v110
  %v126 = vpack.c.b16 %v113, %v112
  %v127 = vpack.c.b16 %v115, %v114
  %v128 = vpack.c.b16 %v117, %v116
  %v129 = vpack.c.b16 %v119, %v118
  %v130 = vpack.c.b16 %v121, %v120
  %v131 = vpack.c.b16 %v123, %v122
  %v156 = vunpack.c.l.b16 %v76
  %v157 = vunpack.c.l.b16 %v77
  %v158 = vunpack.c.l.b16 %v78
  %v159 = vunpack.c.l.b16 %v79
  %v160 = vunpack.c.l.b16 %v80
  %v161 = vunpack.c.l.b16 %v81
  %v162 = vunpack.c.l.b16 %v82
  %v163 = vunpack.c.l.b16 %v83
  %v164 = vunpack.c.l.b16 %v84
  %v165 = vunpack.c.l.b16 %v85
  %v166 = vunpack.c.l.b16 %v86
  %v167 = vunpack.c.l.b16 %v87
  %v168 = vunpack.c.l.b16 %v88
  %v169 = vunpack.c.l.b16 %v89
  %v170 = vunpack.c.l.b16 %v90
  %v171 = vunpack.c.l.b16 %v91
  %v172 = vpack.c.b16 %v157, %v156
  %v173 = vpack.c.b16 %v159, %v158
  %v174 = vpack.c.b16 %v161, %v160
  %v175 = vpack.c.b16 %v163, %v162
  %v176 = vpack.c.b16 %v165, %v164
  %v177 = vpack.c.b16 %v167, %v166
  %v178 = vpack.c.b16 %v169, %v168
  %v179 = vpack.c.b16 %v171, %v170
  %188 = vmatprep.subr.bf16.mxu0 0
  %189 = vmatpush1.bf16.msra.mxu0 %v179
  %190 = vmatprep.subr.bf16.mxu0 0
  %191 = vmatpush1.bf16.msra.mxu0 %v178
  %192 = vmatprep.subr.bf16.mxu0 0
  %193 = vmatpush1.bf16.msra.mxu0 %v177
  %194 = vmatprep.subr.bf16.mxu0 0
  %195 = vmatpush1.bf16.msra.mxu0 %v176
  %196 = vmatprep.subr.bf16.mxu0 0
  %197 = vmatpush1.bf16.msra.mxu0 %v175
  %198 = vmatprep.subr.bf16.mxu0 0
  %199 = vmatpush1.bf16.msra.mxu0 %v174
  %200 = vmatprep.subr.bf16.mxu0 0
  %201 = vmatpush1.bf16.msra.mxu0 %v173
  %202 = vmatprep.subr.bf16.mxu0 0
  %203 = vmatpush1.bf16.msra.mxu0 %v172
  %204 = vmatprep.subr.bf16.mxu0 0
  %205 = vmatpush2.bf16.msra.mxu0 0
  %206 = vmatprep.subr.bf16.mxu0 0
  %207 = vmatpush2.bf16.msra.mxu0 0
  %208 = vmatprep.subr.bf16.mxu0 0
  %209 = vmatpush2.bf16.msra.mxu0 0
  %210 = vmatprep.subr.bf16.mxu0 0
  %211 = vmatpush2.bf16.msra.mxu0 0
  %212 = vmatprep.subr.bf16.mxu0 0
  %213 = vmatpush2.bf16.msra.mxu0 0
  %214 = vmatprep.subr.bf16.mxu0 0
  %215 = vmatpush2.bf16.msra.mxu0 0
  %216 = vmatprep.subr.bf16.mxu0 0
  %217 = vmatpush2.bf16.msra.mxu0 0
  %218 = vmatprep.subr.bf16.mxu0 0
  %219 = vmatpush2.bf16.msra.mxu0 0
  %220 = vmatprep.mubr.bf16.mxu0 0
  %221 = vmatmul.mubr.bf16.gmra.mxu0 %v124
  %v222 = vpop.f32.mrf.mxu0
  %v223 = vadd.f32 0.0, %v222
  %v224 = vpop.f32.mrf.mxu0
  %v225 = vpop.f32.mrf.mxu0
  %v226 = vadd.f32 0.0, %v225
  %v227 = vpop.f32.mrf.mxu0
  %228 = vmatprep.mubr.bf16.mxu0 0
  %229 = vmatmul.mubr.bf16.gmra.mxu0 %v125
  %v230 = vpop.f32.mrf.mxu0
  %v231 = vadd.f32 0.0, %v230
  %v232 = vpop.f32.mrf.mxu0
  %v233 = vpop.f32.mrf.mxu0
  %v234 = vadd.f32 0.0, %v233
  %v235 = vpop.f32.mrf.mxu0
  %236 = vmatprep.mubr.bf16.mxu0 0
  %237 = vmatmul.mubr.bf16.gmra.mxu0 %v126
  %v238 = vpop.f32.mrf.mxu0
  %v239 = vadd.f32 0.0, %v238
  %v240 = vpop.f32.mrf.mxu0
  %v241 = vpop.f32.mrf.mxu0
  %v242 = vadd.f32 0.0, %v241
  %v243 = vpop.f32.mrf.mxu0
  %244 = vmatprep.mubr.bf16.mxu0 0
  %245 = vmatmul.mubr.bf16.gmra.mxu0 %v127
  %v246 = vpop.f32.mrf.mxu0
  %v247 = vadd.f32 0.0, %v246
  %v248 = vpop.f32.mrf.mxu0
  %v249 = vpop.f32.mrf.mxu0
  %v250 = vadd.f32 0.0, %v249
  %v251 = vpop.f32.mrf.mxu0
  %252 = vmatprep.mubr.bf16.mxu0 0
  %253 = vmatmul.mubr.bf16.gmra.mxu0 %v128
  %v254 = vpop.f32.mrf.mxu0
  %v255 = vadd.f32 0.0, %v254
  %v256 = vpop.f32.mrf.mxu0
  %v257 = vpop.f32.mrf.mxu0
  %v258 = vadd.f32 0.0, %v257
  %v259 = vpop.f32.mrf.mxu0
  %260 = vmatprep.mubr.bf16.mxu0 0
  %261 = vmatmul.mubr.bf16.gmra.mxu0 %v129
  %v262 = vpop.f32.mrf.mxu0
  %v263 = vadd.f32 0.0, %v262
  %v264 = vpop.f32.mrf.mxu0
  %v265 = vpop.f32.mrf.mxu0
  %v266 = vadd.f32 0.0, %v265
  %v267 = vpop.f32.mrf.mxu0
  %268 = vmatprep.mubr.bf16.mxu0 0
  %269 = vmatmul.mubr.bf16.gmra.mxu0 %v130
  %v270 = vpop.f32.mrf.mxu0
  %v271 = vadd.f32 0.0, %v270
  %v272 = vpop.f32.mrf.mxu0
  %v273 = vpop.f32.mrf.mxu0
  %v274 = vadd.f32 0.0, %v273
  %v275 = vpop.f32.mrf.mxu0
  %276 = vmatprep.mubr.bf16.mxu0 0
  %277 = vmatmul.mubr.bf16.gmra.mxu0 %v131
  %v278 = vpop.f32.mrf.mxu0
  %v279 = vadd.f32 0.0, %v278
  %v280 = vpop.f32.mrf.mxu0
  %v281 = vpop.f32.mrf.mxu0
  %v282 = vadd.f32 0.0, %v281
  %v283 = vpop.f32.mrf.mxu0
  %284 = vdwg.mxu0
  %v285 = vadd.f32 %v44, %v223
  %v286 = vadd.f32 %v45, %v226
  %v287 = vadd.f32 %v46, %v231
  %v288 = vadd.f32 %v47, %v234
  %v289 = vadd.f32 %v48, %v239
  %v290 = vadd.f32 %v49, %v242
  %v291 = vadd.f32 %v50, %v247
  %v292 = vadd.f32 %v51, %v250
  %v293 = vadd.f32 %v52, %v255
  %v294 = vadd.f32 %v53, %v258
  %v295 = vadd.f32 %v54, %v263
  %v296 = vadd.f32 %v55, %v266
  %v297 = vadd.f32 %v56, %v271
  %v298 = vadd.f32 %v57, %v274
  %v299 = vadd.f32 %v58, %v279
  %v300 = vadd.f32 %v59, %v282
  %301 = vst [vmem:[#allocation2] sm:$0xff] %v285
  %302 = vst [vmem:[#allocation2 + $0x8] sm:$0xff] %v286
  %303 = vst [vmem:[#allocation2 + $0x10] sm:$0xff] %v287
  %304 = vst [vmem:[#allocation2 + $0x18] sm:$0xff] %v288
  %305 = vst [vmem:[#allocation2 + $0x20] sm:$0xff] %v289
  %306 = vst [vmem:[#allocation2 + $0x28] sm:$0xff] %v290
  %307 = vst [vmem:[#allocation2 + $0x30] sm:$0xff] %v291
  %308 = vst [vmem:[#allocation2 + $0x38] sm:$0xff] %v292
  %309 = vst [vmem:[#allocation2 + $0x40] sm:$0xff] %v293
  %310 = vst [vmem:[#allocation2 + $0x48] sm:$0xff] %v294
  %311 = vst [vmem:[#allocation2 + $0x50] sm:$0xff] %v295
  %312 = vst [vmem:[#allocation2 + $0x58] sm:$0xff] %v296
  %313 = vst [vmem:[#allocation2 + $0x60] sm:$0xff] %v297
  %314 = vst [vmem:[#allocation2 + $0x68] sm:$0xff] %v298
  %315 = vst [vmem:[#allocation2 + $0x70] sm:$0xff] %v299
  %316 = vst [vmem:[#allocation2 + $0x78] sm:$0xff] %v300
  // Predicated region
  $region30: #{resgcn_layer.1} parent=0 // pred_check
    %p317 = pneg %p24
  $region31: #{resgcn_layer.1} parent=0 // pred_check_branch
    %319 = sbr.rel (%p317) target = $region33
  $region32: #{resgcn_layer.1} parent=0 // pred_region
    %v320 = vld [vmem:[#allocation2] sm:$0xff]
    %v321 = vld [vmem:[#allocation2 + $0x8] sm:$0xff]
    %v322 = vld [vmem:[#allocation2 + $0x10] sm:$0xff]
    %v323 = vld [vmem:[#allocation2 + $0x18] sm:$0xff]
    %v324 = vld [vmem:[#allocation2 + $0x20] sm:$0xff]
    %v325 = vld [vmem:[#allocation2 + $0x28] sm:$0xff]
    %v326 = vld [vmem:[#allocation2 + $0x30] sm:$0xff]
    %v327 = vld [vmem:[#allocation2 + $0x38] sm:$0xff]
    %v328 = vld [vmem:[#allocation2 + $0x40] sm:$0xff]
    %v329 = vld [vmem:[#allocation2 + $0x48] sm:$0xff]
    %v330 = vld [vmem:[#allocation2 + $0x50] sm:$0xff]
    %v331 = vld [vmem:[#allocation2 + $0x58] sm:$0xff]
    %v332 = vld [vmem:[#allocation2 + $0x60] sm:$0xff]
    %v333 = vld [vmem:[#allocation2 + $0x68] sm:$0xff]
    %v334 = vld [vmem:[#allocation2 + $0x70] sm:$0xff]
    %v335 = vld [vmem:[#allocation2 + $0x78] sm:$0xff]
    %v336 = vld [vmem:[%s3] sm:$0xff]
    %v337 = vld [vmem:[%s3 + $0x8] sm:$0xff]
    %v338 = vld [vmem:[%s3 + $0x10] sm:$0xff]
    %v339 = vld [vmem:[%s3 + $0x18] sm:$0xff]
    %v340 = vld [vmem:[%s3 + $0x20] sm:$0xff]
    %v341 = vld [vmem:[%s3 + $0x28] sm:$0xff]
    %v342 = vld [vmem:[%s3 + $0x30] sm:$0xff]
    %v343 = vld [vmem:[%s3 + $0x38] sm:$0xff]
    %v344 = vld [vmem:[%s3 + $0x40] sm:$0xff]
    %v345 = vld [vmem:[%s3 + $0x48] sm:$0xff]
    %v346 = vld [vmem:[%s3 + $0x50] sm:$0xff]
    %v347 = vld [vmem:[%s3 + $0x58] sm:$0xff]
    %v348 = vld [vmem:[%s3 + $0x60] sm:$0xff]
    %v349 = vld [vmem:[%s3 + $0x68] sm:$0xff]
    %v350 = vld [vmem:[%s3 + $0x70] sm:$0xff]
    %v351 = vld [vmem:[%s3 + $0x78] sm:$0xff]
    %353 = vset.pattern.permute.xlu0 0
    %354 = vperm.xlu0 %353, %v336
    %v355 = vpop.permute.xlu0 %354
    %358 = vset.pattern.permute.xlu0 0
    %359 = vperm.xlu0 %358, %v337
    %v360 = vpop.permute.xlu0 %359
    %363 = vset.pattern.permute.xlu0 0
    %364 = vperm.xlu0 %363, %v338
    %v365 = vpop.permute.xlu0 %364
    %368 = vset.pattern.permute.xlu0 0
    %369 = vperm.xlu0 %368, %v339
    %v370 = vpop.permute.xlu0 %369
    %373 = vset.pattern.permute.xlu0 0
    %374 = vperm.xlu0 %373, %v340
    %v375 = vpop.permute.xlu0 %374
    %378 = vset.pattern.permute.xlu0 0
    %379 = vperm.xlu0 %378, %v341
    %v380 = vpop.permute.xlu0 %379
    %383 = vset.pattern.permute.xlu0 0
    %384 = vperm.xlu0 %383, %v342
    %v385 = vpop.permute.xlu0 %384
    %388 = vset.pattern.permute.xlu0 0
    %389 = vperm.xlu0 %388, %v343
    %v390 = vpop.permute.xlu0 %389
    %393 = vset.pattern.permute.xlu0 0
    %394 = vperm.xlu0 %393, %v344
    %v395 = vpop.permute.xlu0 %394
    %398 = vset.pattern.permute.xlu0 0
    %399 = vperm.xlu0 %398, %v345
    %v400 = vpop.permute.xlu0 %399
    %403 = vset.pattern.permute.xlu0 0
    %404 = vperm.xlu0 %403, %v346
    %v405 = vpop.permute.xlu0 %404
    %408 = vset.pattern.permute.xlu0 0
    %409 = vperm.xlu0 %408, %v347
    %v410 = vpop.permute.xlu0 %409
    %413 = vset.pattern.permute.xlu0 0
    %414 = vperm.xlu0 %413, %v348
    %v415 = vpop.permute.xlu0 %414
    %418 = vset.pattern.permute.xlu0 0
    %419 = vperm.xlu0 %418, %v349
    %v420 = vpop.permute.xlu0 %419
    %423 = vset.pattern.permute.xlu0 0
    %424 = vperm.xlu0 %423, %v350
    %v425 = vpop.permute.xlu0 %424
    %428 = vset.pattern.permute.xlu0 0
    %429 = vperm.xlu0 %428, %v351
    %v430 = vpop.permute.xlu0 %429
    %v432 = vmul.f32 %v320, %v355
    %v433 = vmul.f32 %v321, %v360
    %v434 = vmul.f32 %v322, %v365
    %v435 = vmul.f32 %v323, %v370
    %v436 = vmul.f32 %v324, %v375
    %v437 = vmul.f32 %v325, %v380
    %v438 = vmul.f32 %v326, %v385
    %v439 = vmul.f32 %v327, %v390
    %v440 = vmul.f32 %v328, %v395
    %v441 = vmul.f32 %v329, %v400
    %v442 = vmul.f32 %v330, %v405
    %v443 = vmul.f32 %v331, %v410
    %v444 = vmul.f32 %v332, %v415
    %v445 = vmul.f32 %v333, %v420
    %v446 = vmul.f32 %v334, %v425
    %v447 = vmul.f32 %v335, %v430
    %v448 = vld [vmem:[%s2] sm:$0xff]
    %v449 = vld [vmem:[%s2 + $0x8] sm:$0xff]
    %v450 = vld [vmem:[%s2 + $0x10] sm:$0xff]
    %v451 = vld [vmem:[%s2 + $0x18] sm:$0xff]
    %v452 = vld [vmem:[%s2 + $0x20] sm:$0xff]
    %v453 = vld [vmem:[%s2 + $0x28] sm:$0xff]
    %v454 = vld [vmem:[%s2 + $0x30] sm:$0xff]
    %v455 = vld [vmem:[%s2 + $0x38] sm:$0xff]
    %v456 = vld [vmem:[%s2 + $0x40] sm:$0xff]
    %v457 = vld [vmem:[%s2 + $0x48] sm:$0xff]
    %v458 = vld [vmem:[%s2 + $0x50] sm:$0xff]
    %v459 = vld [vmem:[%s2 + $0x58] sm:$0xff]
    %v460 = vld [vmem:[%s2 + $0x60] sm:$0xff]
    %v461 = vld [vmem:[%s2 + $0x68] sm:$0xff]
    %v462 = vld [vmem:[%s2 + $0x70] sm:$0xff]
    %v463 = vld [vmem:[%s2 + $0x78] sm:$0xff]
    %v464 = vpack.c.bf16 %v433, %v432
    %v465 = vpack.c.bf16 %v435, %v434
    %v466 = vpack.c.bf16 %v437, %v436
    %v467 = vpack.c.bf16 %v439, %v438
    %v468 = vpack.c.bf16 %v441, %v440
    %v469 = vpack.c.bf16 %v443, %v442
    %v470 = vpack.c.bf16 %v445, %v444
    %v471 = vpack.c.bf16 %v447, %v446
    %v480 = vunpack.c.l.b16 %v464
    %v481 = vunpack.c.h.b16 %v464
    %v482 = vunpack.c.l.b16 %v465
    %v483 = vunpack.c.h.b16 %v465
    %v484 = vunpack.c.l.b16 %v466
    %v485 = vunpack.c.h.b16 %v466
    %v486 = vunpack.c.l.b16 %v467
    %v487 = vunpack.c.h.b16 %v467
    %v488 = vunpack.c.l.b16 %v468
    %v489 = vunpack.c.h.b16 %v468
    %v490 = vunpack.c.l.b16 %v469
    %v491 = vunpack.c.h.b16 %v469
    %v492 = vunpack.c.l.b16 %v470
    %v493 = vunpack.c.h.b16 %v470
    %v494 = vunpack.c.l.b16 %v471
    %v495 = vunpack.c.h.b16 %v471
    %v496 = vpack.c.b16 %v480, %v480
    %v497 = vpack.c.b16 %v481, %v481
    %v498 = vpack.c.b16 %v482, %v482
    %v499 = vpack.c.b16 %v483, %v483
    %v500 = vpack.c.b16 %v484, %v484
    %v501 = vpack.c.b16 %v485, %v485
    %v502 = vpack.c.b16 %v486, %v486
    %v503 = vpack.c.b16 %v487, %v487
    %v504 = vpack.c.b16 %v488, %v488
    %v505 = vpack.c.b16 %v489, %v489
    %v506 = vpack.c.b16 %v490, %v490
    %v507 = vpack.c.b16 %v491, %v491
    %v508 = vpack.c.b16 %v492, %v492
    %v509 = vpack.c.b16 %v493, %v493
    %v510 = vpack.c.b16 %v494, %v494
    %v511 = vpack.c.b16 %v495, %v495
    %528 = vst [vmem:[#allocation3] sm:$0xf] %v496
    %529 = vst [vmem:[#allocation3 + $0x8] sm:$0xf] %v497
    %530 = vst [vmem:[#allocation3 + $0x10] sm:$0xf] %v498
    %531 = vst [vmem:[#allocation3 + $0x18] sm:$0xf] %v499
    %532 = vst [vmem:[#allocation3 + $0x20] sm:$0xf] %v500
    %533 = vst [vmem:[#allocation3 + $0x28] sm:$0xf] %v501
    %534 = vst [vmem:[#allocation3 + $0x30] sm:$0xf] %v502
    %535 = vst [vmem:[#allocation3 + $0x38] sm:$0xf] %v503
    %536 = vst [vmem:[#allocation3 + $0x40] sm:$0xf] %v504
    %537 = vst [vmem:[#allocation3 + $0x48] sm:$0xf] %v505
    %538 = vst [vmem:[#allocation3 + $0x50] sm:$0xf] %v506
    %539 = vst [vmem:[#allocation3 + $0x58] sm:$0xf] %v507
    %540 = vst [vmem:[#allocation3 + $0x60] sm:$0xf] %v508
    %541 = vst [vmem:[#allocation3 + $0x68] sm:$0xf] %v509
    %542 = vst [vmem:[#allocation3 + $0x70] sm:$0xf] %v510
    %543 = vst [vmem:[#allocation3 + $0x78] sm:$0xf] %v511
    %v544 = vpack.c.bf16 %v449, %v448
    %v545 = vpack.c.bf16 %v451, %v450
    %v546 = vpack.c.bf16 %v453, %v452
    %v547 = vpack.c.bf16 %v455, %v454
    %v548 = vpack.c.bf16 %v457, %v456
    %v549 = vpack.c.bf16 %v459, %v458
    %v550 = vpack.c.bf16 %v461, %v460
    %v551 = vpack.c.bf16 %v463, %v462
    %v560 = vunpack.c.l.b16 %v544
    %v561 = vunpack.c.h.b16 %v544
    %v562 = vunpack.c.l.b16 %v545
    %v563 = vunpack.c.h.b16 %v545
    %v564 = vunpack.c.l.b16 %v546
    %v565 = vunpack.c.h.b16 %v546
    %v566 = vunpack.c.l.b16 %v547
    %v567 = vunpack.c.h.b16 %v547
    %v568 = vunpack.c.l.b16 %v548
    %v569 = vunpack.c.h.b16 %v548
    %v570 = vunpack.c.l.b16 %v549
    %v571 = vunpack.c.h.b16 %v549
    %v572 = vunpack.c.l.b16 %v550
    %v573 = vunpack.c.h.b16 %v550
    %v574 = vunpack.c.l.b16 %v551
    %v575 = vunpack.c.h.b16 %v551
    %v576 = vpack.c.b16 %v560, %v560
    %v577 = vpack.c.b16 %v561, %v561
    %v578 = vpack.c.b16 %v562, %v562
    %v579 = vpack.c.b16 %v563, %v563
    %v580 = vpack.c.b16 %v564, %v564
    %v581 = vpack.c.b16 %v565, %v565
    %v582 = vpack.c.b16 %v566, %v566
    %v583 = vpack.c.b16 %v567, %v567
    %v584 = vpack.c.b16 %v568, %v568
    %v585 = vpack.c.b16 %v569, %v569
    %v586 = vpack.c.b16 %v570, %v570
    %v587 = vpack.c.b16 %v571, %v571
    %v588 = vpack.c.b16 %v572, %v572
    %v589 = vpack.c.b16 %v573, %v573
    %v590 = vpack.c.b16 %v574, %v574
    %v591 = vpack.c.b16 %v575, %v575
    %608 = vst [vmem:[#allocation3 + $0x4] sm:$0xf] %v576
    %609 = vst [vmem:[#allocation3 + $0xc] sm:$0xf] %v577
    %610 = vst [vmem:[#allocation3 + $0x14] sm:$0xf] %v578
    %611 = vst [vmem:[#allocation3 + $0x1c] sm:$0xf] %v579
    %612 = vst [vmem:[#allocation3 + $0x24] sm:$0xf] %v580
    %613 = vst [vmem:[#allocation3 + $0x2c] sm:$0xf] %v581
    %614 = vst [vmem:[#allocation3 + $0x34] sm:$0xf] %v582
    %615 = vst [vmem:[#allocation3 + $0x3c] sm:$0xf] %v583
    %616 = vst [vmem:[#allocation3 + $0x44] sm:$0xf] %v584
    %617 = vst [vmem:[#allocation3 + $0x4c] sm:$0xf] %v585
    %618 = vst [vmem:[#allocation3 + $0x54] sm:$0xf] %v586
    %619 = vst [vmem:[#allocation3 + $0x5c] sm:$0xf] %v587
    %620 = vst [vmem:[#allocation3 + $0x64] sm:$0xf] %v588
    %621 = vst [vmem:[#allocation3 + $0x6c] sm:$0xf] %v589
    %622 = vst [vmem:[#allocation3 + $0x74] sm:$0xf] %v590
    %623 = vst [vmem:[#allocation3 + $0x7c] sm:$0xf] %v591
    %v624 = vld [vmem:[#allocation3] sm:$0xff]
    %v625 = vld [vmem:[#allocation3 + $0x8] sm:$0xff]
    %v626 = vld [vmem:[#allocation3 + $0x10] sm:$0xff]
    %v627 = vld [vmem:[#allocation3 + $0x18] sm:$0xff]
    %v628 = vld [vmem:[#allocation3 + $0x20] sm:$0xff]
    %v629 = vld [vmem:[#allocation3 + $0x28] sm:$0xff]
    %v630 = vld [vmem:[#allocation3 + $0x30] sm:$0xff]
    %v631 = vld [vmem:[#allocation3 + $0x38] sm:$0xff]
    %v632 = vld [vmem:[#allocation3 + $0x40] sm:$0xff]
    %v633 = vld [vmem:[#allocation3 + $0x48] sm:$0xff]
    %v634 = vld [vmem:[#allocation3 + $0x50] sm:$0xff]
    %v635 = vld [vmem:[#allocation3 + $0x58] sm:$0xff]
    %v636 = vld [vmem:[#allocation3 + $0x60] sm:$0xff]
    %v637 = vld [vmem:[#allocation3 + $0x68] sm:$0xff]
    %v638 = vld [vmem:[#allocation3 + $0x70] sm:$0xff]
    %v639 = vld [vmem:[#allocation3 + $0x78] sm:$0xff]
    %v640 = vld [vmem:[%s4] sm:$0xf]
    %v641 = vld [vmem:[%s4 + $0x4] sm:$0xf]
    %v642 = vld [vmem:[%s4 + $0x8] sm:$0xf]
    %v643 = vld [vmem:[%s4 + $0xc] sm:$0xf]
    %v644 = vld [vmem:[%s4 + $0x10] sm:$0xf]
    %v645 = vld [vmem:[%s4 + $0x14] sm:$0xf]
    %v646 = vld [vmem:[%s4 + $0x18] sm:$0xf]
    %v647 = vld [vmem:[%s4 + $0x1c] sm:$0xf]
    %v648 = vld [vmem:[%s4 + $0x20] sm:$0xf]
    %v649 = vld [vmem:[%s4 + $0x24] sm:$0xf]
    %v650 = vld [vmem:[%s4 + $0x28] sm:$0xf]
    %v651 = vld [vmem:[%s4 + $0x2c] sm:$0xf]
    %v652 = vld [vmem:[%s4 + $0x30] sm:$0xf]
    %v653 = vld [vmem:[%s4 + $0x34] sm:$0xf]
    %v654 = vld [vmem:[%s4 + $0x38] sm:$0xf]
    %v655 = vld [vmem:[%s4 + $0x3c] sm:$0xf]
    %v656 = vld [vmem:[%s4 + $0x40] sm:$0xf]
    %v657 = vld [vmem:[%s4 + $0x44] sm:$0xf]
    %v658 = vld [vmem:[%s4 + $0x48] sm:$0xf]
    %v659 = vld [vmem:[%s4 + $0x4c] sm:$0xf]
    %v660 = vld [vmem:[%s4 + $0x50] sm:$0xf]
    %v661 = vld [vmem:[%s4 + $0x54] sm:$0xf]
    %v662 = vld [vmem:[%s4 + $0x58] sm:$0xf]
    %v663 = vld [vmem:[%s4 + $0x5c] sm:$0xf]
    %v664 = vld [vmem:[%s4 + $0x60] sm:$0xf]
    %v665 = vld [vmem:[%s4 + $0x64] sm:$0xf]
    %v666 = vld [vmem:[%s4 + $0x68] sm:$0xf]
    %v667 = vld [vmem:[%s4 + $0x6c] sm:$0xf]
    %v668 = vld [vmem:[%s4 + $0x70] sm:$0xf]
    %v669 = vld [vmem:[%s4 + $0x74] sm:$0xf]
    %v670 = vld [vmem:[%s4 + $0x78] sm:$0xf]
    %v671 = vld [vmem:[%s4 + $0x7c] sm:$0xf]
    %v672 = vld [vmem:[%s5] sm:$0x1]
    %v674 = vlaneseq
    %v675 = vshrl.u32 %v674, 7
    %v676 = vsub.s32 0, %v675
    %v677 = vrot.slane %v672, %v676
    %v695 = vunpack.c.l.b16 %v624
    %v696 = vunpack.c.h.b16 %v624
    %v697 = vunpack.c.l.b16 %v625
    %v698 = vunpack.c.h.b16 %v625
    %v699 = vunpack.c.l.b16 %v626
    %v700 = vunpack.c.h.b16 %v626
    %v701 = vunpack.c.l.b16 %v627
    %v702 = vunpack.c.h.b16 %v627
    %v703 = vunpack.c.l.b16 %v628
    %v704 = vunpack.c.h.b16 %v628
    %v705 = vunpack.c.l.b16 %v629
    %v706 = vunpack.c.h.b16 %v629
    %v707 = vunpack.c.l.b16 %v630
    %v708 = vunpack.c.h.b16 %v630
    %v709 = vunpack.c.l.b16 %v631
    %v710 = vunpack.c.h.b16 %v631
    %v711 = vunpack.c.l.b16 %v632
    %v712 = vunpack.c.h.b16 %v632
    %v713 = vunpack.c.l.b16 %v633
    %v714 = vunpack.c.h.b16 %v633
    %v715 = vunpack.c.l.b16 %v634
    %v716 = vunpack.c.h.b16 %v634
    %v717 = vunpack.c.l.b16 %v635
    %v718 = vunpack.c.h.b16 %v635
    %v719 = vunpack.c.l.b16 %v636
    %v720 = vunpack.c.h.b16 %v636
    %v721 = vunpack.c.l.b16 %v637
    %v722 = vunpack.c.h.b16 %v637
    %v723 = vunpack.c.l.b16 %v638
    %v724 = vunpack.c.h.b16 %v638
    %v725 = vunpack.c.l.b16 %v639
    %v726 = vunpack.c.h.b16 %v639
    %v727 = vpack.c.b16 %v697, %v695
    %v728 = vpack.c.b16 %v698, %v696
    %v729 = vpack.c.b16 %v701, %v699
    %v730 = vpack.c.b16 %v702, %v700
    %v731 = vpack.c.b16 %v705, %v703
    %v732 = vpack.c.b16 %v706, %v704
    %v733 = vpack.c.b16 %v709, %v707
    %v734 = vpack.c.b16 %v710, %v708
    %v735 = vpack.c.b16 %v713, %v711
    %v736 = vpack.c.b16 %v714, %v712
    %v737 = vpack.c.b16 %v717, %v715
    %v738 = vpack.c.b16 %v718, %v716
    %v739 = vpack.c.b16 %v721, %v719
    %v740 = vpack.c.b16 %v722, %v720
    %v741 = vpack.c.b16 %v725, %v723
    %v742 = vpack.c.b16 %v726, %v724
    %v791 = vunpack.c.l.b16 %v640
    %v792 = vunpack.c.l.b16 %v641
    %v793 = vunpack.c.l.b16 %v642
    %v794 = vunpack.c.l.b16 %v643
    %v795 = vunpack.c.l.b16 %v644
    %v796 = vunpack.c.l.b16 %v645
    %v797 = vunpack.c.l.b16 %v646
    %v798 = vunpack.c.l.b16 %v647
    %v799 = vunpack.c.l.b16 %v648
    %v800 = vunpack.c.l.b16 %v649
    %v801 = vunpack.c.l.b16 %v650
    %v802 = vunpack.c.l.b16 %v651
    %v803 = vunpack.c.l.b16 %v652
    %v804 = vunpack.c.l.b16 %v653
    %v805 = vunpack.c.l.b16 %v654
    %v806 = vunpack.c.l.b16 %v655
    %v807 = vunpack.c.l.b16 %v656
    %v808 = vunpack.c.l.b16 %v657
    %v809 = vunpack.c.l.b16 %v658
    %v810 = vunpack.c.l.b16 %v659
    %v811 = vunpack.c.l.b16 %v660
    %v812 = vunpack.c.l.b16 %v661
    %v813 = vunpack.c.l.b16 %v662
    %v814 = vunpack.c.l.b16 %v663
    %v815 = vunpack.c.l.b16 %v664
    %v816 = vunpack.c.l.b16 %v665
    %v817 = vunpack.c.l.b16 %v666
    %v818 = vunpack.c.l.b16 %v667
    %v819 = vunpack.c.l.b16 %v668
    %v820 = vunpack.c.l.b16 %v669
    %v821 = vunpack.c.l.b16 %v670
    %v822 = vunpack.c.l.b16 %v671
    %v823 = vpack.c.b16 %v792, %v791
    %v824 = vpack.c.b16 %v794, %v793
    %v825 = vpack.c.b16 %v796, %v795
    %v826 = vpack.c.b16 %v798, %v797
    %v827 = vpack.c.b16 %v800, %v799
    %v828 = vpack.c.b16 %v802, %v801
    %v829 = vpack.c.b16 %v804, %v803
    %v830 = vpack.c.b16 %v806, %v805
    %v831 = vpack.c.b16 %v808, %v807
    %v832 = vpack.c.b16 %v810, %v809
    %v833 = vpack.c.b16 %v812, %v811
    %v834 = vpack.c.b16 %v814, %v813
    %v835 = vpack.c.b16 %v816, %v815
    %v836 = vpack.c.b16 %v818, %v817
    %v837 = vpack.c.b16 %v820, %v819
    %v838 = vpack.c.b16 %v822, %v821
    %855 = vmatprep.subr.bf16.mxu0 0
    %856 = vmatpush1.bf16.msra.mxu0 %v830
    %857 = vmatprep.subr.bf16.mxu0 0
    %858 = vmatpush1.bf16.msra.mxu0 %v829
    %859 = vmatprep.subr.bf16.mxu0 0
    %860 = vmatpush1.bf16.msra.mxu0 %v828
    %861 = vmatprep.subr.bf16.mxu0 0
    %862 = vmatpush1.bf16.msra.mxu0 %v827
    %863 = vmatprep.subr.bf16.mxu0 0
    %864 = vmatpush1.bf16.msra.mxu0 %v826
    %865 = vmatprep.subr.bf16.mxu0 0
    %866 = vmatpush1.bf16.msra.mxu0 %v825
    %867 = vmatprep.subr.bf16.mxu0 0
    %868 = vmatpush1.bf16.msra.mxu0 %v824
    %869 = vmatprep.subr.bf16.mxu0 0
    %870 = vmatpush1.bf16.msra.mxu0 %v823
    %871 = vmatprep.subr.bf16.mxu0 0
    %872 = vmatpush2.bf16.msra.mxu0 %v838
    %873 = vmatprep.subr.bf16.mxu0 0
    %874 = vmatpush2.bf16.msra.mxu0 %v837
    %875 = vmatprep.subr.bf16.mxu0 0
    %876 = vmatpush2.bf16.msra.mxu0 %v836
    %877 = vmatprep.subr.bf16.mxu0 0
    %878 = vmatpush2.bf16.msra.mxu0 %v835
    %879 = vmatprep.subr.bf16.mxu0 0
    %880 = vmatpush2.bf16.msra.mxu0 %v834
    %881 = vmatprep.subr.bf16.mxu0 0
    %882 = vmatpush2.bf16.msra.mxu0 %v833
    %883 = vmatprep.subr.bf16.mxu0 0
    %884 = vmatpush2.bf16.msra.mxu0 %v832
    %885 = vmatprep.subr.bf16.mxu0 0
    %886 = vmatpush2.bf16.msra.mxu0 %v831
    %887 = vmatprep.mubr.bf16.mxu0 %v728
    %888 = vmatmul.mubr.bf16.gmra.mxu0 %v727
    %v889 = vpop.f32.mrf.mxu0
    %v890 = vadd.f32 %v677, %v889
    %v891 = vpop.f32.mrf.mxu0
    %v892 = vpop.f32.mrf.mxu0
    %v893 = vadd.f32 %v677, %v892
    %v894 = vpop.f32.mrf.mxu0
    %895 = vmatprep.mubr.bf16.mxu0 %v730
    %896 = vmatmul.mubr.bf16.gmra.mxu0 %v729
    %v897 = vpop.f32.mrf.mxu0
    %v898 = vadd.f32 %v677, %v897
    %v899 = vpop.f32.mrf.mxu0
    %v900 = vpop.f32.mrf.mxu0
    %v901 = vadd.f32 %v677, %v900
    %v902 = vpop.f32.mrf.mxu0
    %903 = vmatprep.mubr.bf16.mxu0 %v732
    %904 = vmatmul.mubr.bf16.gmra.mxu0 %v731
    %v905 = vpop.f32.mrf.mxu0
    %v906 = vadd.f32 %v677, %v905
    %v907 = vpop.f32.mrf.mxu0
    %v908 = vpop.f32.mrf.mxu0
    %v909 = vadd.f32 %v677, %v908
    %v910 = vpop.f32.mrf.mxu0
    %911 = vmatprep.mubr.bf16.mxu0 %v734
    %912 = vmatmul.mubr.bf16.gmra.mxu0 %v733
    %v913 = vpop.f32.mrf.mxu0
    %v914 = vadd.f32 %v677, %v913
    %v915 = vpop.f32.mrf.mxu0
    %v916 = vpop.f32.mrf.mxu0
    %v917 = vadd.f32 %v677, %v916
    %v918 = vpop.f32.mrf.mxu0
    %919 = vmatprep.mubr.bf16.mxu0 %v736
    %920 = vmatmul.mubr.bf16.gmra.mxu0 %v735
    %v921 = vpop.f32.mrf.mxu0
    %v922 = vadd.f32 %v677, %v921
    %v923 = vpop.f32.mrf.mxu0
    %v924 = vpop.f32.mrf.mxu0
    %v925 = vadd.f32 %v677, %v924
    %v926 = vpop.f32.mrf.mxu0
    %927 = vmatprep.mubr.bf16.mxu0 %v738
    %928 = vmatmul.mubr.bf16.gmra.mxu0 %v737
    %v929 = vpop.f32.mrf.mxu0
    %v930 = vadd.f32 %v677, %v929
    %v931 = vpop.f32.mrf.mxu0
    %v932 = vpop.f32.mrf.mxu0
    %v933 = vadd.f32 %v677, %v932
    %v934 = vpop.f32.mrf.mxu0
    %935 = vmatprep.mubr.bf16.mxu0 %v740
    %936 = vmatmul.mubr.bf16.gmra.mxu0 %v739
    %v937 = vpop.f32.mrf.mxu0
    %v938 = vadd.f32 %v677, %v937
    %v939 = vpop.f32.mrf.mxu0
    %v940 = vpop.f32.mrf.mxu0
    %v941 = vadd.f32 %v677, %v940
    %v942 = vpop.f32.mrf.mxu0
    %943 = vmatprep.mubr.bf16.mxu0 %v742
    %944 = vmatmul.mubr.bf16.gmra.mxu0 %v741
    %v945 = vpop.f32.mrf.mxu0
    %v946 = vadd.f32 %v677, %v945
    %v947 = vpop.f32.mrf.mxu0
    %v948 = vpop.f32.mrf.mxu0
    %v949 = vadd.f32 %v677, %v948
    %v950 = vpop.f32.mrf.mxu0
    %951 = vdwg.mxu0
    %v952 = vadd.f32 %v890, %v448
    %v953 = vadd.f32 %v893, %v449
    %v954 = vadd.f32 %v898, %v450
    %v955 = vadd.f32 %v901, %v451
    %v956 = vadd.f32 %v906, %v452
    %v957 = vadd.f32 %v909, %v453
    %v958 = vadd.f32 %v914, %v454
    %v959 = vadd.f32 %v917, %v455
    %v960 = vadd.f32 %v922, %v456
    %v961 = vadd.f32 %v925, %v457
    %v962 = vadd.f32 %v930, %v458
    %v963 = vadd.f32 %v933, %v459
    %v964 = vadd.f32 %v938, %v460
    %v965 = vadd.f32 %v941, %v461
    %v966 = vadd.f32 %v946, %v462
    %v967 = vadd.f32 %v949, %v463
    %968 = vst [vmem:[%s6] sm:$0xff] %v952
    %969 = vst [vmem:[%s6 + $0x8] sm:$0xff] %v953
    %970 = vst [vmem:[%s6 + $0x10] sm:$0xff] %v954
    %971 = vst [vmem:[%s6 + $0x18] sm:$0xff] %v955
    %972 = vst [vmem:[%s6 + $0x20] sm:$0xff] %v956
    %973 = vst [vmem:[%s6 + $0x28] sm:$0xff] %v957
    %974 = vst [vmem:[%s6 + $0x30] sm:$0xff] %v958
    %975 = vst [vmem:[%s6 + $0x38] sm:$0xff] %v959
    %976 = vst [vmem:[%s6 + $0x40] sm:$0xff] %v960
    %977 = vst [vmem:[%s6 + $0x48] sm:$0xff] %v961
    %978 = vst [vmem:[%s6 + $0x50] sm:$0xff] %v962
    %979 = vst [vmem:[%s6 + $0x58] sm:$0xff] %v963
    %980 = vst [vmem:[%s6 + $0x60] sm:$0xff] %v964
    %981 = vst [vmem:[%s6 + $0x68] sm:$0xff] %v965
    %982 = vst [vmem:[%s6 + $0x70] sm:$0xff] %v966
    %983 = vst [vmem:[%s6 + $0x78] sm:$0xff] %v967
  $region33: #{resgcn_layer.1} parent=0 // pred_fallthru
    _
  // Predicated region
  $region34: #{resgcn_layer.1} parent=0 // pred_check
    _
  $region35: #{resgcn_layer.1} parent=0 // pred_check_branch
    %985 = sbr.rel (0) target = $region37
  $region36: #{resgcn_layer.1} parent=0 // pred_region
    _
  $region37: #{resgcn_layer.1} parent=0 // pred_fallthru
    _
  // Predicated region
  $region38: #{resgcn_layer.1} parent=0 // pred_check
    _
  $region39: #{resgcn_layer.1} parent=0 // pred_check_branch
    %987 = sbr.rel (0) target = $region41
  $region40: #{resgcn_layer.1} parent=0 // pred_region
    _
  $region41: #{resgcn_layer.1} parent=0 // pred_fallthru
    _

</llo_original>
